<compile_context>
chip_gen: v5e
topology: v5e:2x2
jax: 0.10.0
libtpu: 0.0.40
codegen_flags: <defaults>
</compile_context>

<pallas_src>
import functools

import jax
import jax.numpy as jnp
from jax import lax
from jax.experimental import pallas as pl
from jax.experimental.pallas import tpu as pltpu


def _ray_associator_kernel(occ_ref, pos_ref, assoc_ref, *, occ_threshold, P, K):
    # occ_ref block: (P, K, TILE_R) — rays on the lane axis, fully dense.
    # --- max / first-occurrence argmax over parts K (unrolled fold, VPU only) ---
    best = occ_ref[:, 0, :]                                  # (P, TR)
    best_k = jnp.zeros(best.shape, jnp.int32)                # (P, TR)
    for k in range(1, K):
        cand = occ_ref[:, k, :]                              # (P, TR)
        take = cand > best                                   # strict '>' keeps first occurrence
        best = jnp.where(take, cand, best)
        best_k = jnp.where(take, jnp.int32(k), best_k)
    # NOTE: NaNs in occ are never selected past position 0 (comparisons are False),
    # matching "finite input" assumption; torch would propagate NaN.

    # --- threshold + per-ray reduction over points P (sublane-axis reductions) ---
    points_in = best.astype(jnp.float32) >= jnp.float32(occ_threshold)      # (P, TR) bool
    pos = jnp.max(points_in.astype(jnp.int32), axis=0, keepdims=True)       # (1, TR) 0/1

    p_iota = lax.broadcasted_iota(jnp.int32, points_in.shape, 0)            # (P, TR)
    first_true = jnp.min(jnp.where(points_in, p_iota, P), axis=0, keepdims=True)  # (1, TR)
    # torch.max on a bool tensor: index of first True if any, else index 0.
    pt_idx = jnp.where(pos > 0, first_true, 0)                              # (1, TR)

    # gather part index (best_k) at pt_idx along P: one-hot select + reduce
    sel = p_iota == pt_idx                                                  # (P, TR)
    assoc = jnp.max(jnp.where(sel, best_k, -1), axis=0, keepdims=True)      # (1, TR)

    pos_ref[...] = pos
    assoc_ref[...] = assoc


def _pick_tile_rays(R, requested=None, max_tile=2048):
    """Largest lane-aligned tile dividing R, keeping >= 2 grid steps (v7x: 2 TCs)."""
    if requested is not None:
        assert requested % 128 == 0, "tile_rays must be a multiple of 128"
        return requested
    t = max_tile
    while t > 128:
        if R % t == 0 and R // t >= 2:
            return t
        t //= 2
    return 128


def ray_associator_pkr(occ_pkr, occ_threshold=0.5, tile_rays=None):
    """Core entry point: occ in (P, K, R) layout (rays on the minor/lane axis).

    Returns (positive_rays bool (R,), ray_associations int32 (R,)).
    """
    P, K, R = occ_pkr.shape
    tile = _pick_tile_rays(R, tile_rays)
    R_pad = pl.cdiv(R, tile) * tile
    if R_pad != R:
        # zero-padded rays are all below threshold -> sliced off below, harmless
        occ_pkr = jnp.pad(occ_pkr, ((0, 0), (0, 0), (0, R_pad - R)))
    grid = (R_pad // tile,)

    itemsize = occ_pkr.dtype.itemsize
    in_block_bytes = P * K * tile * itemsize
    # double-buffered input + tiny outputs + headroom; capped at 32 MiB (<= v7x physical VMEM)
    vmem_limit = int(min(32 * 1024 * 1024, max(8 * 1024 * 1024, 4 * in_block_bytes)))

    kernel = functools.partial(
        _ray_associator_kernel, occ_threshold=float(occ_threshold), P=P, K=K
    )

    pos2d, assoc2d = pl.pallas_call(
        kernel,
        out_shape=(
            jax.ShapeDtypeStruct((1, R_pad), jnp.int32),
            jax.ShapeDtypeStruct((1, R_pad), jnp.int32),
        ),
        grid=grid,
        in_specs=[pl.BlockSpec((P, K, tile), lambda i: (0, 0, i))],
        out_specs=(
            pl.BlockSpec((1, tile), lambda i: (0, i)),
            pl.BlockSpec((1, tile), lambda i: (0, i)),
        ),
        compiler_params=pltpu.CompilerParams(
            dimension_semantics=("parallel",),
            vmem_limit_bytes=vmem_limit,
        ),
    )(occ_pkr)

    positive = pos2d[0, :R].astype(jnp.bool_)
    assoc = assoc2d[0, :R]
    # torch returns (bool, int64); int32 indices are sufficient here (K < 2^31).
    return positive, assoc


def ray_associator(occ, occ_threshold=0.5, tile_rays=None):
    """Module-compatible entry point: occ is (R, P, K) float, as in the torch module.

    TODO(synk): producer should emit (P, K, R) directly (call ray_associator_pkr) to
    avoid this wrapper transpose — it is pure layout plumbing.
    """
    R, P, K = occ.shape
    occ_pkr = jnp.transpose(occ, (1, 2, 0))      # (P, K, R): rays on the lane axis
    return ray_associator_pkr(occ_pkr, occ_threshold=occ_threshold, tile_rays=tile_rays)


def _ray_associator_ref(occ, occ_threshold=0.5):
    """Pure-JAX reference mirroring the torch forward."""
    max_occ = jnp.max(occ, axis=-1)
    part_idx = jnp.argmax(occ, axis=-1)
    points_in = max_occ >= occ_threshold
    positive = jnp.any(points_in, axis=-1)
    pt_idx = jnp.argmax(points_in, axis=-1)      # first True, or 0 if none (same as torch.max)
    assoc = jnp.take_along_axis(part_idx, pt_idx[:, None], axis=-1)[:, 0]
    return positive, assoc.astype(jnp.int32)


if __name__ == "__main__":
    key = jax.random.PRNGKey(0)
    R, P, K = 256, 16, 8                                  # rays, points-per-ray, parts
    occ = jax.random.uniform(key, (R, P, K), dtype=jnp.float32)
    # Force a few rays below threshold so both branches (positive / non-positive) are exercised.
    occ = occ.at[:8].multiply(0.1)

    positive_rays, ray_assoc = ray_associator(occ, occ_threshold=0.5)
    jax.block_until_ready((positive_rays, ray_assoc))

    ref_pos, ref_assoc = _ray_associator_ref(occ, occ_threshold=0.5)
    assert bool(jnp.all(positive_rays == ref_pos)), "positive_rays mismatch"
    assert bool(jnp.all(ray_assoc == ref_assoc)), "ray_associations mismatch"

    print("KERNEL_OK")
</pallas_src>

<mosaic_0001>
module attributes {stable_mosaic.version = 11 : i64} {
  func.func @_ray_associator_kernel(%arg0: i32, %arg1: memref<16x8x128xf32, #tpu.memory_space<vmem>>, %arg2: memref<1x128xi32, #tpu.memory_space<vmem>>, %arg3: memref<1x128xi32, #tpu.memory_space<vmem>>) attributes {dimension_semantics = [#tpu.dimension_semantics<parallel>], iteration_bounds = array<i64: 2>, scalar_prefetch = 0 : i64, scratch_operands = 0 : i64, tpu.core_type = #tpu.core_type<tc>, window_params = [{transform_indices = @transform_0, window_bounds = array<i64: 16, 8, 128>}, {transform_indices = @transform_1, window_bounds = array<i64: 1, 128>}, {transform_indices = @transform_2, window_bounds = array<i64: 1, 128>}]} {
    %c0 = arith.constant 0 : index
    %c0_0 = arith.constant 0 : index
    %c0_1 = arith.constant 0 : index
    %0 = vector.load %arg1[%c0, %c0_0, %c0_1] : memref<16x8x128xf32, #tpu.memory_space<vmem>>, vector<16x1x128xf32>
    %1 = vector.shape_cast %0 : vector<16x1x128xf32> to vector<16x128xf32>
    %c0_i32 = arith.constant 0 : i32
    %2 = vector.broadcast %c0_i32 : i32 to vector<16x128xi32>
    %c0_2 = arith.constant 0 : index
    %c1 = arith.constant 1 : index
    %c0_3 = arith.constant 0 : index
    %3 = vector.load %arg1[%c0_2, %c1, %c0_3] : memref<16x8x128xf32, #tpu.memory_space<vmem>>, vector<16x1x128xf32>
    %4 = vector.shape_cast %3 : vector<16x1x128xf32> to vector<16x128xf32>
    %5 = arith.cmpf ogt, %4, %1 : vector<16x128xf32>
    %6 = arith.select %5, %4, %1 : vector<16x128xi1>, vector<16x128xf32>
    %c1_i32 = arith.constant 1 : i32
    %7 = vector.broadcast %c1_i32 : i32 to vector<16x128xi32>
    %8 = arith.select %5, %7, %2 : vector<16x128xi1>, vector<16x128xi32>
    %c0_4 = arith.constant 0 : index
    %c2 = arith.constant 2 : index
    %c0_5 = arith.constant 0 : index
    %9 = vector.load %arg1[%c0_4, %c2, %c0_5] : memref<16x8x128xf32, #tpu.memory_space<vmem>>, vector<16x1x128xf32>
    %10 = vector.shape_cast %9 : vector<16x1x128xf32> to vector<16x128xf32>
    %11 = arith.cmpf ogt, %10, %6 : vector<16x128xf32>
    %12 = arith.select %11, %10, %6 : vector<16x128xi1>, vector<16x128xf32>
    %c2_i32 = arith.constant 2 : i32
    %13 = vector.broadcast %c2_i32 : i32 to vector<16x128xi32>
    %14 = arith.select %11, %13, %8 : vector<16x128xi1>, vector<16x128xi32>
    %c0_6 = arith.constant 0 : index
    %c3 = arith.constant 3 : index
    %c0_7 = arith.constant 0 : index
    %15 = vector.load %arg1[%c0_6, %c3, %c0_7] : memref<16x8x128xf32, #tpu.memory_space<vmem>>, vector<16x1x128xf32>
    %16 = vector.shape_cast %15 : vector<16x1x128xf32> to vector<16x128xf32>
    %17 = arith.cmpf ogt, %16, %12 : vector<16x128xf32>
    %18 = arith.select %17, %16, %12 : vector<16x128xi1>, vector<16x128xf32>
    %c3_i32 = arith.constant 3 : i32
    %19 = vector.broadcast %c3_i32 : i32 to vector<16x128xi32>
    %20 = arith.select %17, %19, %14 : vector<16x128xi1>, vector<16x128xi32>
    %c0_8 = arith.constant 0 : index
    %c4 = arith.constant 4 : index
    %c0_9 = arith.constant 0 : index
    %21 = vector.load %arg1[%c0_8, %c4, %c0_9] : memref<16x8x128xf32, #tpu.memory_space<vmem>>, vector<16x1x128xf32>
    %22 = vector.shape_cast %21 : vector<16x1x128xf32> to vector<16x128xf32>
    %23 = arith.cmpf ogt, %22, %18 : vector<16x128xf32>
    %24 = arith.select %23, %22, %18 : vector<16x128xi1>, vector<16x128xf32>
    %c4_i32 = arith.constant 4 : i32
    %25 = vector.broadcast %c4_i32 : i32 to vector<16x128xi32>
    %26 = arith.select %23, %25, %20 : vector<16x128xi1>, vector<16x128xi32>
    %c0_10 = arith.constant 0 : index
    %c5 = arith.constant 5 : index
    %c0_11 = arith.constant 0 : index
    %27 = vector.load %arg1[%c0_10, %c5, %c0_11] : memref<16x8x128xf32, #tpu.memory_space<vmem>>, vector<16x1x128xf32>
    %28 = vector.shape_cast %27 : vector<16x1x128xf32> to vector<16x128xf32>
    %29 = arith.cmpf ogt, %28, %24 : vector<16x128xf32>
    %30 = arith.select %29, %28, %24 : vector<16x128xi1>, vector<16x128xf32>
    %c5_i32 = arith.constant 5 : i32
    %31 = vector.broadcast %c5_i32 : i32 to vector<16x128xi32>
    %32 = arith.select %29, %31, %26 : vector<16x128xi1>, vector<16x128xi32>
    %c0_12 = arith.constant 0 : index
    %c6 = arith.constant 6 : index
    %c0_13 = arith.constant 0 : index
    %33 = vector.load %arg1[%c0_12, %c6, %c0_13] : memref<16x8x128xf32, #tpu.memory_space<vmem>>, vector<16x1x128xf32>
    %34 = vector.shape_cast %33 : vector<16x1x128xf32> to vector<16x128xf32>
    %35 = arith.cmpf ogt, %34, %30 : vector<16x128xf32>
    %36 = arith.select %35, %34, %30 : vector<16x128xi1>, vector<16x128xf32>
    %c6_i32 = arith.constant 6 : i32
    %37 = vector.broadcast %c6_i32 : i32 to vector<16x128xi32>
    %38 = arith.select %35, %37, %32 : vector<16x128xi1>, vector<16x128xi32>
    %c0_14 = arith.constant 0 : index
    %c7 = arith.constant 7 : index
    %c0_15 = arith.constant 0 : index
    %39 = vector.load %arg1[%c0_14, %c7, %c0_15] : memref<16x8x128xf32, #tpu.memory_space<vmem>>, vector<16x1x128xf32>
    %40 = vector.shape_cast %39 : vector<16x1x128xf32> to vector<16x128xf32>
    %41 = arith.cmpf ogt, %40, %36 : vector<16x128xf32>
    %42 = arith.select %41, %40, %36 : vector<16x128xi1>, vector<16x128xf32>
    %c7_i32 = arith.constant 7 : i32
    %43 = vector.broadcast %c7_i32 : i32 to vector<16x128xi32>
    %44 = arith.select %41, %43, %38 : vector<16x128xi1>, vector<16x128xi32>
    %cst = arith.constant 5.000000e-01 : f32
    %45 = vector.broadcast %cst : f32 to vector<16x128xf32>
    %46 = arith.cmpf oge, %42, %45 : vector<16x128xf32>
    %47 = arith.extui %46 : vector<16x128xi1> to vector<16x128xi32>
    %cst_16 = arith.constant dense<-2147483648> : vector<128xi32>
    %48 = vector.multi_reduction <maxsi>, %47, %cst_16 [0] : vector<16x128xi32> to vector<128xi32>
    %49 = vector.shape_cast %48 : vector<128xi32> to vector<1x128xi32>
    %50 = tpu.iota {dimensions = array<i32: 0>} : vector<16x128xi32>
    %c16_i32 = arith.constant 16 : i32
    %51 = vector.broadcast %c16_i32 : i32 to vector<16x128xi32>
    %52 = arith.select %46, %50, %51 : vector<16x128xi1>, vector<16x128xi32>
    %cst_17 = arith.constant dense<2147483647> : vector<128xi32>
    %53 = vector.multi_reduction <minsi>, %52, %cst_17 [0] : vector<16x128xi32> to vector<128xi32>
    %54 = vector.shape_cast %53 : vector<128xi32> to vector<1x128xi32>
    %c0_i32_18 = arith.constant 0 : i32
    %55 = vector.broadcast %c0_i32_18 : i32 to vector<1x128xi32>
    %56 = arith.cmpi sgt, %49, %55 : vector<1x128xi32>
    %c0_i32_19 = arith.constant 0 : i32
    %57 = vector.broadcast %c0_i32_19 : i32 to vector<1x128xi32>
    %58 = arith.select %56, %54, %57 : vector<1x128xi1>, vector<1x128xi32>
    %59 = vector.broadcast %58 : vector<1x128xi32> to vector<16x128xi32>
    %60 = arith.cmpi eq, %50, %59 : vector<16x128xi32>
    %c-1_i32 = arith.constant -1 : i32
    %61 = vector.broadcast %c-1_i32 : i32 to vector<16x128xi32>
    %62 = arith.select %60, %44, %61 : vector<16x128xi1>, vector<16x128xi32>
    %cst_20 = arith.constant dense<-2147483648> : vector<128xi32>
    %63 = vector.multi_reduction <maxsi>, %62, %cst_20 [0] : vector<16x128xi32> to vector<128xi32>
    %64 = vector.shape_cast %63 : vector<128xi32> to vector<1x128xi32>
    %c0_21 = arith.constant 0 : index
    %c0_22 = arith.constant 0 : index
    %65 = vector.load %arg2[%c0_21, %c0_22] : memref<1x128xi32, #tpu.memory_space<vmem>>, vector<1x128xi32>
    tpu.vector_store %arg2[%c0_21, %c0_22], %49 {strides = array<i32>} : memref<1x128xi32, #tpu.memory_space<vmem>>, vector<1x128xi32>,
    %c0_23 = arith.constant 0 : index
    %c0_24 = arith.constant 0 : index
    %66 = vector.load %arg3[%c0_23, %c0_24] : memref<1x128xi32, #tpu.memory_space<vmem>>, vector<1x128xi32>
    tpu.vector_store %arg3[%c0_23, %c0_24], %64 {strides = array<i32>} : memref<1x128xi32, #tpu.memory_space<vmem>>, vector<1x128xi32>,
    return
  }
  func.func @transform_0(%arg0: i32) -> (i32, i32, i32) {
    %c0_i32 = arith.constant 0 : i32
    %c0_i32_0 = arith.constant 0 : i32
    %c0_i32_1 = arith.constant 0 : i32
    return %c0_i32, %c0_i32_0, %arg0 : i32, i32, i32
  }
  func.func @transform_1(%arg0: i32) -> (i32, i32) {
    %c0_i32 = arith.constant 0 : i32
    %c0_i32_0 = arith.constant 0 : i32
    return %c0_i32, %arg0 : i32, i32
  }
  func.func @transform_2(%arg0: i32) -> (i32, i32) {
    %c0_i32 = arith.constant 0 : i32
    %c0_i32_0 = arith.constant 0 : i32
    return %c0_i32, %arg0 : i32, i32
  }
}

</mosaic_0001>

<llo_original>
// kernel: tpu_custom_call.1
$region0: #{tpu_custom_call.1}
  #allocation0 [shape = 'u32[]', space=smem, size = 0x4, offset = 0x4, fixed_abs, tag = 'smem constant byte address 0x4 - core index']
  #allocation1 [shape = 'u32[72,128]{1,0:T(1,128)}', space=vmem, size = 0x9000, scoped, tag = 'internal scratch']
  %s0 = inlined_call_operand.hbm [shape: f32[16,8,256], index: 0, kind: input, shape index: {}]
  %s1 = inlined_call_operand.hbm [shape: s32[1,256], index: 1, kind: output, shape index: {0}]
  %s2 = inlined_call_operand.hbm [shape: s32[1,256], index: 2, kind: output, shape index: {1}]
  %3 = xla_tuple %s1, %s2
  %s4 = sld [smem:[#allocation0]]
  $region49: #{tpu_custom_call.1} parent=0
    _
  %s6 = ssub.s32 1, %s4
  %s7 = scalar_select 0, %s6, %s4
  $region1: #{tpu_custom_call.1} parent=0
    #allocation2 [shape = 'u8[131072]{0}', space=vmem, size = 0x20000, scoped, tag = 'input window, operand 0']
    #allocation3 [shape = 's32[2]{0}', space=sflag, size = 0x8, scoped, tag = 'scoped memory for tpu_custom_call.1']
    #allocation4 [shape = 's32[2]{0}', space=sflag, size = 0x8, scoped, tag = 'scoped memory for tpu_custom_call.1']
    #allocation5 [shape = 'u8[1024]{0}', space=vmem, size = 0x400, scoped, tag = 'output window, operand 0']
    #allocation6 [shape = 'u8[1024]{0}', space=vmem, size = 0x400, scoped, tag = 'output window, operand 1']
    #allocation7 [shape = 's32[2]{0}', space=sflag, size = 0x8, scoped, tag = 'scoped memory for tpu_custom_call.1']
    %8 = vsyncpa [#allocation3], 0
    %s9 = scalar_lea.sflag [#allocation3], 1
    %10 = vsyncpa %s9, 0
    %11 = vsyncpa [#allocation4], 0
    %s12 = scalar_lea.sflag [#allocation4], 1
    %13 = vsyncpa %s12, 0
    %14 = vsyncpa [#allocation7], 0
    %s15 = scalar_lea.sflag [#allocation7], 1
    %16 = vsyncpa %s15, 0
    loop: start=0, step=1, limit=4
    $region2: #{tpu_custom_call.1} parent=1 // loop_pre_header
      _
    $region3: #{tpu_custom_call.1} parent=1 // loop_header
      %s18 = sphi 0, %s22
      %p19 = scmp.ge.s32.totalorder %s18, 4
      %s28 = sphi 0, %s30
      %s31 = sphi 0, %s28
      %s32 = sphi 0, %s31
      %s48 = sphi 0, %s32
      %s54 = sphi 0, %s56
      %s57 = sphi 0, %s54
      %s58 = sphi 0, %s57
      %s74 = sphi 0, %s58
      %s80 = sphi 0, %s82
      %s83 = sphi 0, %s80
      %s84 = sphi 0, %s83
      %s100 = sphi 0, %s84
    $region4: #{tpu_custom_call.1} parent=1 // loop_header_branch
      %21 = sbr.rel (%p19) target = $region8
    $region5: #{tpu_custom_call.1} parent=1 // loop_body
      %s23 = ssub.s32 %s18, 1
      %s24 = ssub.s32 %s18, 2
      %s25 = sadd.s32 %s18, 1
      %s26 = ssub.s32 %s18, %s25
      %p27 = scmp.eq.s32.totalorder %s26, 0
      %s29 = sadd.s32 %s28, 1
      %s30 = scalar_select %p27, %s28, %s29
      %p33 = pneg %p27
      %p34 = scmp.eq.s32.totalorder %s18, 1
      %p35 = por %p33, %p34
      %p36 = scmp.ne.s32.totalorder %s28, %s31
      %p37 = scmp.eq.s32.totalorder %s18, 0
      %p38 = por %p36, %p37
      %p39 = scmp.ne.s32.totalorder %s28, %s31
      %p40 = scmp.eq.s32.totalorder %s23, 1
      %p41 = por %p39, %p40
      %p42 = scmp.ne.s32.totalorder %s31, %s32
      %p43 = scmp.eq.s32.totalorder %s23, 0
      %p44 = por %p42, %p43
      %p45 = scmp.ne.s32.totalorder %s31, %s32
      %p46 = scmp.eq.s32.totalorder %s24, 1
      %p47 = por %p45, %p46
      %p49 = scmp.ne.s32.totalorder %s32, %s48
      %p50 = scmp.eq.s32.totalorder %s24, 0
      %p51 = por %p49, %p50
      %s52 = ssub.s32 %s18, %s25
      %p53 = scmp.eq.s32.totalorder %s52, 0
      %s55 = sadd.s32 %s54, 1
      %s56 = scalar_select %p53, %s54, %s55
      %p59 = pneg %p53
      %p60 = scmp.eq.s32.totalorder %s18, 1
      %p61 = por %p59, %p60
      %p62 = scmp.ne.s32.totalorder %s54, %s57
      %p63 = scmp.eq.s32.totalorder %s18, 0
      %p64 = por %p62, %p63
      %p65 = scmp.ne.s32.totalorder %s54, %s57
      %p66 = scmp.eq.s32.totalorder %s23, 1
      %p67 = por %p65, %p66
      %p68 = scmp.ne.s32.totalorder %s57, %s58
      %p69 = scmp.eq.s32.totalorder %s23, 0
      %p70 = por %p68, %p69
      %p71 = scmp.ne.s32.totalorder %s57, %s58
      %p72 = scmp.eq.s32.totalorder %s24, 1
      %p73 = por %p71, %p72
      %p75 = scmp.ne.s32.totalorder %s58, %s74
      %p76 = scmp.eq.s32.totalorder %s24, 0
      %p77 = por %p75, %p76
      %s78 = ssub.s32 %s18, %s25
      %p79 = scmp.eq.s32.totalorder %s78, 0
      %s81 = sadd.s32 %s80, 1
      %s82 = scalar_select %p79, %s80, %s81
      %p85 = pneg %p79
      %p86 = scmp.eq.s32.totalorder %s18, 1
      %p87 = por %p85, %p86
      %p88 = scmp.ne.s32.totalorder %s80, %s83
      %p89 = scmp.eq.s32.totalorder %s18, 0
      %p90 = por %p88, %p89
      %p91 = scmp.ne.s32.totalorder %s80, %s83
      %p92 = scmp.eq.s32.totalorder %s23, 1
      %p93 = por %p91, %p92
      %p94 = scmp.ne.s32.totalorder %s83, %s84
      %p95 = scmp.eq.s32.totalorder %s23, 0
      %p96 = por %p94, %p95
      %p97 = scmp.ne.s32.totalorder %s83, %s84
      %p98 = scmp.eq.s32.totalorder %s24, 1
      %p99 = por %p97, %p98
      %p101 = scmp.ne.s32.totalorder %s84, %s100
      %p102 = scmp.eq.s32.totalorder %s24, 0
      %p103 = por %p101, %p102
      %p104 = scmp.le.s32.totalorder 1, %s18
      %p105 = scmp.lt.s32.totalorder %s18, 3
      %p106 = pnand %p104, %p105
      %p107 = pneg %p106
      // Predicated region
      $region9: #{tpu_custom_call.1} parent=5 // pred_check
        _
      $region10: #{tpu_custom_call.1} parent=5 // pred_check_branch
        %109 = sbr.rel (%p106) target = $region12
      $region11: #{tpu_custom_call.1} parent=5 // pred_region
        %s110 = ssub.s32 %s18, 1
      $region12: #{tpu_custom_call.1} parent=5 // pred_fallthru
        _
      %p111 = scmp.lt.s32.totalorder %s18, 2
      // Predicated region
      $region13: #{tpu_custom_call.1} parent=5 // pred_check
        %p112 = pneg %p111
      $region14: #{tpu_custom_call.1} parent=5 // pred_check_branch
        %114 = sbr.rel (%p112) target = $region16
      $region15: #{tpu_custom_call.1} parent=5 // pred_region
        // Predicated region
        $region17: #{tpu_custom_call.1} parent=15 // pred_check
          %p115 = pneg %p38
        $region18: #{tpu_custom_call.1} parent=15 // pred_check_branch
          %117 = sbr.rel (%p115) target = $region20
        $region19: #{tpu_custom_call.1} parent=15 // pred_region
          %s118 = sand.u32 %s28, 1
          %s119 = scalar_lea.sflag [#allocation3], %s118
          %s120 = sand.u32 %s28, 1
          %s121 = smul.addr %s120, 128
          %s122 = scalar_lea.vmem [#allocation2], %s121
          %124 = vsyncadd %s119, 0
          %s125 = smul.addr %s18, 8
          %s126 = scalar_lea.hbm %s0, %s125
          %s127 = sshll.u32 %s126, 4
          %s128 = int_to_ptr.hbm [resolvable:$true] %s127
          %s129 = sshll.u32 %s122, 4
          %s130 = int_to_ptr.vmem [resolvable:$true] %s129
          %135 = dma.hbm_to_vmem [thread:$0]  %s128, 2048, %s130, %s119, 256, 128, 8
        $region20: #{tpu_custom_call.1} parent=15 // pred_fallthru
          _
      $region16: #{tpu_custom_call.1} parent=5 // pred_fallthru
        _
      %p136 = scmp.le.s32.totalorder 1, %s18
      %p137 = scmp.lt.s32.totalorder %s18, 3
      %p138 = pnand %p136, %p137
      %p139 = pneg %p138
      // Predicated region
      $region21: #{tpu_custom_call.1} parent=5 // pred_check
        _
      $region22: #{tpu_custom_call.1} parent=5 // pred_check_branch
        %141 = sbr.rel (%p138) target = $region24
      $region23: #{tpu_custom_call.1} parent=5 // pred_region
        %s142 = ssub.s32 %s18, 1
        %s143 = sand.u32 %s31, 1
        %s144 = scalar_lea.sflag [#allocation3], %s143
        %s145 = sand.u32 %s31, 1
        %s146 = smul.addr %s145, 128
        %s147 = scalar_lea.vmem [#allocation2], %s146
        // Predicated region
        $region25: #{tpu_custom_call.1} parent=23 // pred_check
          %p148 = pneg %p44
        $region26: #{tpu_custom_call.1} parent=23 // pred_check_branch
          %150 = sbr.rel (%p148) target = $region28
        $region27: #{tpu_custom_call.1} parent=23 // pred_region
          %152 = dma.done %s144, 2048
        $region28: #{tpu_custom_call.1} parent=23 // pred_fallthru
          _
        %s153 = sand.u32 %s31, 1
        %s154 = scalar_lea.sflag [#allocation3], %s153
        %s155 = sand.u32 %s31, 1
        %s156 = smul.addr %s155, 128
        %s157 = scalar_lea.vmem [#allocation2], %s156
        %p158 = pneg %p44
        %p159 = pneg %p41
        %p160 = pneg %p70
        %p161 = pneg %p67
        %s162 = sand.u32 %s57, 1
        %s163 = scalar_lea.sflag [#allocation4], %s162
        %s164 = sand.u32 %s57, 1
        %s165 = scalar_lea.vmem [#allocation5], %s164
        %p166 = pneg %p96
        %p167 = pneg %p93
        %s168 = sand.u32 %s83, 1
        %s169 = scalar_lea.sflag [#allocation7], %s168
        %s170 = sand.u32 %s83, 1
        %s171 = scalar_lea.vmem [#allocation6], %s170
        %v172 = vld [vmem:[%s147] sm:$0x1]
        %v173 = vld [vmem:[%s147 + $0x8] sm:$0x1]
        %v174 = vld [vmem:[%s147 + $0x10] sm:$0x1]
        %v175 = vld [vmem:[%s147 + $0x18] sm:$0x1]
        %v176 = vld [vmem:[%s147 + $0x20] sm:$0x1]
        %v177 = vld [vmem:[%s147 + $0x28] sm:$0x1]
        %v178 = vld [vmem:[%s147 + $0x30] sm:$0x1]
        %v179 = vld [vmem:[%s147 + $0x38] sm:$0x1]
        %v180 = vld [vmem:[%s147 + $0x40] sm:$0x1]
        %v181 = vld [vmem:[%s147 + $0x48] sm:$0x1]
        %v182 = vld [vmem:[%s147 + $0x50] sm:$0x1]
        %v183 = vld [vmem:[%s147 + $0x58] sm:$0x1]
        %v184 = vld [vmem:[%s147 + $0x60] sm:$0x1]
        %v185 = vld [vmem:[%s147 + $0x68] sm:$0x1]
        %v186 = vld [vmem:[%s147 + $0x70] sm:$0x1]
        %v187 = vld [vmem:[%s147 + $0x78] sm:$0x1]
        %v188 = vld [vmem:[%s147 + $0x1] sm:$0x1]
        %v189 = vld [vmem:[%s147 + $0x9] sm:$0x1]
        %v190 = vld [vmem:[%s147 + $0x11] sm:$0x1]
        %v191 = vld [vmem:[%s147 + $0x19] sm:$0x1]
        %v192 = vld [vmem:[%s147 + $0x21] sm:$0x1]
        %v193 = vld [vmem:[%s147 + $0x29] sm:$0x1]
        %v194 = vld [vmem:[%s147 + $0x31] sm:$0x1]
        %v195 = vld [vmem:[%s147 + $0x39] sm:$0x1]
        %v196 = vld [vmem:[%s147 + $0x41] sm:$0x1]
        %v197 = vld [vmem:[%s147 + $0x49] sm:$0x1]
        %v198 = vld [vmem:[%s147 + $0x51] sm:$0x1]
        %v199 = vld [vmem:[%s147 + $0x59] sm:$0x1]
        %v200 = vld [vmem:[%s147 + $0x61] sm:$0x1]
        %v201 = vld [vmem:[%s147 + $0x69] sm:$0x1]
        %v202 = vld [vmem:[%s147 + $0x71] sm:$0x1]
        %v203 = vld [vmem:[%s147 + $0x79] sm:$0x1]
        %vm204 = vcmp.gt.f32.partialorder %v188, %v172
        %vm205 = vcmp.gt.f32.partialorder %v189, %v173
        %vm206 = vcmp.gt.f32.partialorder %v190, %v174
        %vm207 = vcmp.gt.f32.partialorder %v191, %v175
        %vm208 = vcmp.gt.f32.partialorder %v192, %v176
        %vm209 = vcmp.gt.f32.partialorder %v193, %v177
        %vm210 = vcmp.gt.f32.partialorder %v194, %v178
        %vm211 = vcmp.gt.f32.partialorder %v195, %v179
        %vm212 = vcmp.gt.f32.partialorder %v196, %v180
        %vm213 = vcmp.gt.f32.partialorder %v197, %v181
        %vm214 = vcmp.gt.f32.partialorder %v198, %v182
        %vm215 = vcmp.gt.f32.partialorder %v199, %v183
        %vm216 = vcmp.gt.f32.partialorder %v200, %v184
        %vm217 = vcmp.gt.f32.partialorder %v201, %v185
        %vm218 = vcmp.gt.f32.partialorder %v202, %v186
        %vm219 = vcmp.gt.f32.partialorder %v203, %v187
        %v220 = vsel %vm204, %v188, %v172
        %v221 = vsel %vm205, %v189, %v173
        %v222 = vsel %vm206, %v190, %v174
        %v223 = vsel %vm207, %v191, %v175
        %v224 = vsel %vm208, %v192, %v176
        %v225 = vsel %vm209, %v193, %v177
        %v226 = vsel %vm210, %v194, %v178
        %v227 = vsel %vm211, %v195, %v179
        %v228 = vsel %vm212, %v196, %v180
        %v229 = vsel %vm213, %v197, %v181
        %v230 = vsel %vm214, %v198, %v182
        %v231 = vsel %vm215, %v199, %v183
        %v232 = vsel %vm216, %v200, %v184
        %v233 = vsel %vm217, %v201, %v185
        %v234 = vsel %vm218, %v202, %v186
        %v235 = vsel %vm219, %v203, %v187
        %v236 = vsel %vm204, 1, 0
        %v237 = vsel %vm205, 1, 0
        %v238 = vsel %vm206, 1, 0
        %v239 = vsel %vm207, 1, 0
        %v240 = vsel %vm208, 1, 0
        %v241 = vsel %vm209, 1, 0
        %v242 = vsel %vm210, 1, 0
        %v243 = vsel %vm211, 1, 0
        %v244 = vsel %vm212, 1, 0
        %v245 = vsel %vm213, 1, 0
        %v246 = vsel %vm214, 1, 0
        %v247 = vsel %vm215, 1, 0
        %v248 = vsel %vm216, 1, 0
        %v249 = vsel %vm217, 1, 0
        %v250 = vsel %vm218, 1, 0
        %v251 = vsel %vm219, 1, 0
        %v252 = vld [vmem:[%s147 + $0x2] sm:$0x1]
        %v253 = vld [vmem:[%s147 + $0xa] sm:$0x1]
        %v254 = vld [vmem:[%s147 + $0x12] sm:$0x1]
        %v255 = vld [vmem:[%s147 + $0x1a] sm:$0x1]
        %v256 = vld [vmem:[%s147 + $0x22] sm:$0x1]
        %v257 = vld [vmem:[%s147 + $0x2a] sm:$0x1]
        %v258 = vld [vmem:[%s147 + $0x32] sm:$0x1]
        %v259 = vld [vmem:[%s147 + $0x3a] sm:$0x1]
        %v260 = vld [vmem:[%s147 + $0x42] sm:$0x1]
        %v261 = vld [vmem:[%s147 + $0x4a] sm:$0x1]
        %v262 = vld [vmem:[%s147 + $0x52] sm:$0x1]
        %v263 = vld [vmem:[%s147 + $0x5a] sm:$0x1]
        %v264 = vld [vmem:[%s147 + $0x62] sm:$0x1]
        %v265 = vld [vmem:[%s147 + $0x6a] sm:$0x1]
        %v266 = vld [vmem:[%s147 + $0x72] sm:$0x1]
        %v267 = vld [vmem:[%s147 + $0x7a] sm:$0x1]
        %vm268 = vcmp.gt.f32.partialorder %v252, %v220
        %vm269 = vcmp.gt.f32.partialorder %v253, %v221
        %vm270 = vcmp.gt.f32.partialorder %v254, %v222
        %vm271 = vcmp.gt.f32.partialorder %v255, %v223
        %vm272 = vcmp.gt.f32.partialorder %v256, %v224
        %vm273 = vcmp.gt.f32.partialorder %v257, %v225
        %vm274 = vcmp.gt.f32.partialorder %v258, %v226
        %vm275 = vcmp.gt.f32.partialorder %v259, %v227
        %vm276 = vcmp.gt.f32.partialorder %v260, %v228
        %vm277 = vcmp.gt.f32.partialorder %v261, %v229
        %vm278 = vcmp.gt.f32.partialorder %v262, %v230
        %vm279 = vcmp.gt.f32.partialorder %v263, %v231
        %vm280 = vcmp.gt.f32.partialorder %v264, %v232
        %vm281 = vcmp.gt.f32.partialorder %v265, %v233
        %vm282 = vcmp.gt.f32.partialorder %v266, %v234
        %vm283 = vcmp.gt.f32.partialorder %v267, %v235
        %v284 = vsel %vm268, %v252, %v220
        %v285 = vsel %vm269, %v253, %v221
        %v286 = vsel %vm270, %v254, %v222
        %v287 = vsel %vm271, %v255, %v223
        %v288 = vsel %vm272, %v256, %v224
        %v289 = vsel %vm273, %v257, %v225
        %v290 = vsel %vm274, %v258, %v226
        %v291 = vsel %vm275, %v259, %v227
        %v292 = vsel %vm276, %v260, %v228
        %v293 = vsel %vm277, %v261, %v229
        %v294 = vsel %vm278, %v262, %v230
        %v295 = vsel %vm279, %v263, %v231
        %v296 = vsel %vm280, %v264, %v232
        %v297 = vsel %vm281, %v265, %v233
        %v298 = vsel %vm282, %v266, %v234
        %v299 = vsel %vm283, %v267, %v235
        %v300 = vsel %vm268, 2, %v236
        %v301 = vsel %vm269, 2, %v237
        %v302 = vsel %vm270, 2, %v238
        %v303 = vsel %vm271, 2, %v239
        %v304 = vsel %vm272, 2, %v240
        %v305 = vsel %vm273, 2, %v241
        %v306 = vsel %vm274, 2, %v242
        %v307 = vsel %vm275, 2, %v243
        %v308 = vsel %vm276, 2, %v244
        %v309 = vsel %vm277, 2, %v245
        %v310 = vsel %vm278, 2, %v246
        %v311 = vsel %vm279, 2, %v247
        %v312 = vsel %vm280, 2, %v248
        %v313 = vsel %vm281, 2, %v249
        %v314 = vsel %vm282, 2, %v250
        %v315 = vsel %vm283, 2, %v251
        %v316 = vld [vmem:[%s147 + $0x3] sm:$0x1]
        %v317 = vld [vmem:[%s147 + $0xb] sm:$0x1]
        %v318 = vld [vmem:[%s147 + $0x13] sm:$0x1]
        %v319 = vld [vmem:[%s147 + $0x1b] sm:$0x1]
        %v320 = vld [vmem:[%s147 + $0x23] sm:$0x1]
        %v321 = vld [vmem:[%s147 + $0x2b] sm:$0x1]
        %v322 = vld [vmem:[%s147 + $0x33] sm:$0x1]
        %v323 = vld [vmem:[%s147 + $0x3b] sm:$0x1]
        %v324 = vld [vmem:[%s147 + $0x43] sm:$0x1]
        %v325 = vld [vmem:[%s147 + $0x4b] sm:$0x1]
        %v326 = vld [vmem:[%s147 + $0x53] sm:$0x1]
        %v327 = vld [vmem:[%s147 + $0x5b] sm:$0x1]
        %v328 = vld [vmem:[%s147 + $0x63] sm:$0x1]
        %v329 = vld [vmem:[%s147 + $0x6b] sm:$0x1]
        %v330 = vld [vmem:[%s147 + $0x73] sm:$0x1]
        %v331 = vld [vmem:[%s147 + $0x7b] sm:$0x1]
        %vm332 = vcmp.gt.f32.partialorder %v316, %v284
        %vm333 = vcmp.gt.f32.partialorder %v317, %v285
        %vm334 = vcmp.gt.f32.partialorder %v318, %v286
        %vm335 = vcmp.gt.f32.partialorder %v319, %v287
        %vm336 = vcmp.gt.f32.partialorder %v320, %v288
        %vm337 = vcmp.gt.f32.partialorder %v321, %v289
        %vm338 = vcmp.gt.f32.partialorder %v322, %v290
        %vm339 = vcmp.gt.f32.partialorder %v323, %v291
        %vm340 = vcmp.gt.f32.partialorder %v324, %v292
        %vm341 = vcmp.gt.f32.partialorder %v325, %v293
        %vm342 = vcmp.gt.f32.partialorder %v326, %v294
        %vm343 = vcmp.gt.f32.partialorder %v327, %v295
        %vm344 = vcmp.gt.f32.partialorder %v328, %v296
        %vm345 = vcmp.gt.f32.partialorder %v329, %v297
        %vm346 = vcmp.gt.f32.partialorder %v330, %v298
        %vm347 = vcmp.gt.f32.partialorder %v331, %v299
        %v348 = vsel %vm332, %v316, %v284
        %v349 = vsel %vm333, %v317, %v285
        %v350 = vsel %vm334, %v318, %v286
        %v351 = vsel %vm335, %v319, %v287
        %v352 = vsel %vm336, %v320, %v288
        %v353 = vsel %vm337, %v321, %v289
        %v354 = vsel %vm338, %v322, %v290
        %v355 = vsel %vm339, %v323, %v291
        %v356 = vsel %vm340, %v324, %v292
        %v357 = vsel %vm341, %v325, %v293
        %v358 = vsel %vm342, %v326, %v294
        %v359 = vsel %vm343, %v327, %v295
        %v360 = vsel %vm344, %v328, %v296
        %v361 = vsel %vm345, %v329, %v297
        %v362 = vsel %vm346, %v330, %v298
        %v363 = vsel %vm347, %v331, %v299
        %v364 = vsel %vm332, 3, %v300
        %v365 = vsel %vm333, 3, %v301
        %v366 = vsel %vm334, 3, %v302
        %v367 = vsel %vm335, 3, %v303
        %v368 = vsel %vm336, 3, %v304
        %v369 = vsel %vm337, 3, %v305
        %v370 = vsel %vm338, 3, %v306
        %v371 = vsel %vm339, 3, %v307
        %v372 = vsel %vm340, 3, %v308
        %v373 = vsel %vm341, 3, %v309
        %v374 = vsel %vm342, 3, %v310
        %v375 = vsel %vm343, 3, %v311
        %v376 = vsel %vm344, 3, %v312
        %v377 = vsel %vm345, 3, %v313
        %v378 = vsel %vm346, 3, %v314
        %v379 = vsel %vm347, 3, %v315
        %v380 = vld [vmem:[%s147 + $0x4] sm:$0x1]
        %v381 = vld [vmem:[%s147 + $0xc] sm:$0x1]
        %v382 = vld [vmem:[%s147 + $0x14] sm:$0x1]
        %v383 = vld [vmem:[%s147 + $0x1c] sm:$0x1]
        %v384 = vld [vmem:[%s147 + $0x24] sm:$0x1]
        %v385 = vld [vmem:[%s147 + $0x2c] sm:$0x1]
        %v386 = vld [vmem:[%s147 + $0x34] sm:$0x1]
        %v387 = vld [vmem:[%s147 + $0x3c] sm:$0x1]
        %v388 = vld [vmem:[%s147 + $0x44] sm:$0x1]
        %v389 = vld [vmem:[%s147 + $0x4c] sm:$0x1]
        %v390 = vld [vmem:[%s147 + $0x54] sm:$0x1]
        %v391 = vld [vmem:[%s147 + $0x5c] sm:$0x1]
        %v392 = vld [vmem:[%s147 + $0x64] sm:$0x1]
        %v393 = vld [vmem:[%s147 + $0x6c] sm:$0x1]
        %v394 = vld [vmem:[%s147 + $0x74] sm:$0x1]
        %v395 = vld [vmem:[%s147 + $0x7c] sm:$0x1]
        %vm396 = vcmp.gt.f32.partialorder %v380, %v348
        %vm397 = vcmp.gt.f32.partialorder %v381, %v349
        %vm398 = vcmp.gt.f32.partialorder %v382, %v350
        %vm399 = vcmp.gt.f32.partialorder %v383, %v351
        %vm400 = vcmp.gt.f32.partialorder %v384, %v352
        %vm401 = vcmp.gt.f32.partialorder %v385, %v353
        %vm402 = vcmp.gt.f32.partialorder %v386, %v354
        %vm403 = vcmp.gt.f32.partialorder %v387, %v355
        %vm404 = vcmp.gt.f32.partialorder %v388, %v356
        %vm405 = vcmp.gt.f32.partialorder %v389, %v357
        %vm406 = vcmp.gt.f32.partialorder %v390, %v358
        %vm407 = vcmp.gt.f32.partialorder %v391, %v359
        %vm408 = vcmp.gt.f32.partialorder %v392, %v360
        %vm409 = vcmp.gt.f32.partialorder %v393, %v361
        %vm410 = vcmp.gt.f32.partialorder %v394, %v362
        %vm411 = vcmp.gt.f32.partialorder %v395, %v363
        %v412 = vsel %vm396, %v380, %v348
        %v413 = vsel %vm397, %v381, %v349
        %v414 = vsel %vm398, %v382, %v350
        %v415 = vsel %vm399, %v383, %v351
        %v416 = vsel %vm400, %v384, %v352
        %v417 = vsel %vm401, %v385, %v353
        %v418 = vsel %vm402, %v386, %v354
        %v419 = vsel %vm403, %v387, %v355
        %v420 = vsel %vm404, %v388, %v356
        %v421 = vsel %vm405, %v389, %v357
        %v422 = vsel %vm406, %v390, %v358
        %v423 = vsel %vm407, %v391, %v359
        %v424 = vsel %vm408, %v392, %v360
        %v425 = vsel %vm409, %v393, %v361
        %v426 = vsel %vm410, %v394, %v362
        %v427 = vsel %vm411, %v395, %v363
        %v428 = vsel %vm396, 4, %v364
        %v429 = vsel %vm397, 4, %v365
        %v430 = vsel %vm398, 4, %v366
        %v431 = vsel %vm399, 4, %v367
        %v432 = vsel %vm400, 4, %v368
        %v433 = vsel %vm401, 4, %v369
        %v434 = vsel %vm402, 4, %v370
        %v435 = vsel %vm403, 4, %v371
        %v436 = vsel %vm404, 4, %v372
        %v437 = vsel %vm405, 4, %v373
        %v438 = vsel %vm406, 4, %v374
        %v439 = vsel %vm407, 4, %v375
        %v440 = vsel %vm408, 4, %v376
        %v441 = vsel %vm409, 4, %v377
        %v442 = vsel %vm410, 4, %v378
        %v443 = vsel %vm411, 4, %v379
        %v444 = vld [vmem:[%s147 + $0x5] sm:$0x1]
        %v445 = vld [vmem:[%s147 + $0xd] sm:$0x1]
        %v446 = vld [vmem:[%s147 + $0x15] sm:$0x1]
        %v447 = vld [vmem:[%s147 + $0x1d] sm:$0x1]
        %v448 = vld [vmem:[%s147 + $0x25] sm:$0x1]
        %v449 = vld [vmem:[%s147 + $0x2d] sm:$0x1]
        %v450 = vld [vmem:[%s147 + $0x35] sm:$0x1]
        %v451 = vld [vmem:[%s147 + $0x3d] sm:$0x1]
        %v452 = vld [vmem:[%s147 + $0x45] sm:$0x1]
        %v453 = vld [vmem:[%s147 + $0x4d] sm:$0x1]
        %v454 = vld [vmem:[%s147 + $0x55] sm:$0x1]
        %v455 = vld [vmem:[%s147 + $0x5d] sm:$0x1]
        %v456 = vld [vmem:[%s147 + $0x65] sm:$0x1]
        %v457 = vld [vmem:[%s147 + $0x6d] sm:$0x1]
        %v458 = vld [vmem:[%s147 + $0x75] sm:$0x1]
        %v459 = vld [vmem:[%s147 + $0x7d] sm:$0x1]
        %vm460 = vcmp.gt.f32.partialorder %v444, %v412
        %vm461 = vcmp.gt.f32.partialorder %v445, %v413
        %vm462 = vcmp.gt.f32.partialorder %v446, %v414
        %vm463 = vcmp.gt.f32.partialorder %v447, %v415
        %vm464 = vcmp.gt.f32.partialorder %v448, %v416
        %vm465 = vcmp.gt.f32.partialorder %v449, %v417
        %vm466 = vcmp.gt.f32.partialorder %v450, %v418
        %vm467 = vcmp.gt.f32.partialorder %v451, %v419
        %vm468 = vcmp.gt.f32.partialorder %v452, %v420
        %vm469 = vcmp.gt.f32.partialorder %v453, %v421
        %vm470 = vcmp.gt.f32.partialorder %v454, %v422
        %vm471 = vcmp.gt.f32.partialorder %v455, %v423
        %vm472 = vcmp.gt.f32.partialorder %v456, %v424
        %vm473 = vcmp.gt.f32.partialorder %v457, %v425
        %vm474 = vcmp.gt.f32.partialorder %v458, %v426
        %vm475 = vcmp.gt.f32.partialorder %v459, %v427
        %v476 = vsel %vm460, %v444, %v412
        %v477 = vsel %vm461, %v445, %v413
        %v478 = vsel %vm462, %v446, %v414
        %v479 = vsel %vm463, %v447, %v415
        %v480 = vsel %vm464, %v448, %v416
        %v481 = vsel %vm465, %v449, %v417
        %v482 = vsel %vm466, %v450, %v418
        %v483 = vsel %vm467, %v451, %v419
        %v484 = vsel %vm468, %v452, %v420
        %v485 = vsel %vm469, %v453, %v421
        %v486 = vsel %vm470, %v454, %v422
        %v487 = vsel %vm471, %v455, %v423
        %v488 = vsel %vm472, %v456, %v424
        %v489 = vsel %vm473, %v457, %v425
        %v490 = vsel %vm474, %v458, %v426
        %v491 = vsel %vm475, %v459, %v427
        %v492 = vsel %vm460, 5, %v428
        %v493 = vsel %vm461, 5, %v429
        %v494 = vsel %vm462, 5, %v430
        %v495 = vsel %vm463, 5, %v431
        %v496 = vsel %vm464, 5, %v432
        %v497 = vsel %vm465, 5, %v433
        %v498 = vsel %vm466, 5, %v434
        %v499 = vsel %vm467, 5, %v435
        %v500 = vsel %vm468, 5, %v436
        %v501 = vsel %vm469, 5, %v437
        %v502 = vsel %vm470, 5, %v438
        %v503 = vsel %vm471, 5, %v439
        %v504 = vsel %vm472, 5, %v440
        %v505 = vsel %vm473, 5, %v441
        %v506 = vsel %vm474, 5, %v442
        %v507 = vsel %vm475, 5, %v443
        %v508 = vld [vmem:[%s147 + $0x6] sm:$0x1]
        %v509 = vld [vmem:[%s147 + $0xe] sm:$0x1]
        %v510 = vld [vmem:[%s147 + $0x16] sm:$0x1]
        %v511 = vld [vmem:[%s147 + $0x1e] sm:$0x1]
        %v512 = vld [vmem:[%s147 + $0x26] sm:$0x1]
        %v513 = vld [vmem:[%s147 + $0x2e] sm:$0x1]
        %v514 = vld [vmem:[%s147 + $0x36] sm:$0x1]
        %v515 = vld [vmem:[%s147 + $0x3e] sm:$0x1]
        %v516 = vld [vmem:[%s147 + $0x46] sm:$0x1]
        %v517 = vld [vmem:[%s147 + $0x4e] sm:$0x1]
        %v518 = vld [vmem:[%s147 + $0x56] sm:$0x1]
        %v519 = vld [vmem:[%s147 + $0x5e] sm:$0x1]
        %v520 = vld [vmem:[%s147 + $0x66] sm:$0x1]
        %v521 = vld [vmem:[%s147 + $0x6e] sm:$0x1]
        %v522 = vld [vmem:[%s147 + $0x76] sm:$0x1]
        %v523 = vld [vmem:[%s147 + $0x7e] sm:$0x1]
        %vm524 = vcmp.gt.f32.partialorder %v508, %v476
        %vm525 = vcmp.gt.f32.partialorder %v509, %v477
        %vm526 = vcmp.gt.f32.partialorder %v510, %v478
        %vm527 = vcmp.gt.f32.partialorder %v511, %v479
        %vm528 = vcmp.gt.f32.partialorder %v512, %v480
        %vm529 = vcmp.gt.f32.partialorder %v513, %v481
        %vm530 = vcmp.gt.f32.partialorder %v514, %v482
        %vm531 = vcmp.gt.f32.partialorder %v515, %v483
        %vm532 = vcmp.gt.f32.partialorder %v516, %v484
        %vm533 = vcmp.gt.f32.partialorder %v517, %v485
        %vm534 = vcmp.gt.f32.partialorder %v518, %v486
        %vm535 = vcmp.gt.f32.partialorder %v519, %v487
        %vm536 = vcmp.gt.f32.partialorder %v520, %v488
        %vm537 = vcmp.gt.f32.partialorder %v521, %v489
        %vm538 = vcmp.gt.f32.partialorder %v522, %v490
        %vm539 = vcmp.gt.f32.partialorder %v523, %v491
        %v540 = vsel %vm524, %v508, %v476
        %v541 = vsel %vm525, %v509, %v477
        %v542 = vsel %vm526, %v510, %v478
        %v543 = vsel %vm527, %v511, %v479
        %v544 = vsel %vm528, %v512, %v480
        %v545 = vsel %vm529, %v513, %v481
        %v546 = vsel %vm530, %v514, %v482
        %v547 = vsel %vm531, %v515, %v483
        %v548 = vsel %vm532, %v516, %v484
        %v549 = vsel %vm533, %v517, %v485
        %v550 = vsel %vm534, %v518, %v486
        %v551 = vsel %vm535, %v519, %v487
        %v552 = vsel %vm536, %v520, %v488
        %v553 = vsel %vm537, %v521, %v489
        %v554 = vsel %vm538, %v522, %v490
        %v555 = vsel %vm539, %v523, %v491
        %v556 = vsel %vm524, 6, %v492
        %v557 = vsel %vm525, 6, %v493
        %v558 = vsel %vm526, 6, %v494
        %v559 = vsel %vm527, 6, %v495
        %v560 = vsel %vm528, 6, %v496
        %v561 = vsel %vm529, 6, %v497
        %v562 = vsel %vm530, 6, %v498
        %v563 = vsel %vm531, 6, %v499
        %v564 = vsel %vm532, 6, %v500
        %v565 = vsel %vm533, 6, %v501
        %v566 = vsel %vm534, 6, %v502
        %v567 = vsel %vm535, 6, %v503
        %v568 = vsel %vm536, 6, %v504
        %v569 = vsel %vm537, 6, %v505
        %v570 = vsel %vm538, 6, %v506
        %v571 = vsel %vm539, 6, %v507
        %v572 = vld [vmem:[%s147 + $0x7] sm:$0x1]
        %v573 = vld [vmem:[%s147 + $0xf] sm:$0x1]
        %v574 = vld [vmem:[%s147 + $0x17] sm:$0x1]
        %v575 = vld [vmem:[%s147 + $0x1f] sm:$0x1]
        %v576 = vld [vmem:[%s147 + $0x27] sm:$0x1]
        %v577 = vld [vmem:[%s147 + $0x2f] sm:$0x1]
        %v578 = vld [vmem:[%s147 + $0x37] sm:$0x1]
        %v579 = vld [vmem:[%s147 + $0x3f] sm:$0x1]
        %v580 = vld [vmem:[%s147 + $0x47] sm:$0x1]
        %v581 = vld [vmem:[%s147 + $0x4f] sm:$0x1]
        %v582 = vld [vmem:[%s147 + $0x57] sm:$0x1]
        %v583 = vld [vmem:[%s147 + $0x5f] sm:$0x1]
        %v584 = vld [vmem:[%s147 + $0x67] sm:$0x1]
        %v585 = vld [vmem:[%s147 + $0x6f] sm:$0x1]
        %v586 = vld [vmem:[%s147 + $0x77] sm:$0x1]
        %v587 = vld [vmem:[%s147 + $0x7f] sm:$0x1]
        %vm588 = vcmp.gt.f32.partialorder %v572, %v540
        %vm589 = vcmp.gt.f32.partialorder %v573, %v541
        %vm590 = vcmp.gt.f32.partialorder %v574, %v542
        %vm591 = vcmp.gt.f32.partialorder %v575, %v543
        %vm592 = vcmp.gt.f32.partialorder %v576, %v544
        %vm593 = vcmp.gt.f32.partialorder %v577, %v545
        %vm594 = vcmp.gt.f32.partialorder %v578, %v546
        %vm595 = vcmp.gt.f32.partialorder %v579, %v547
        %vm596 = vcmp.gt.f32.partialorder %v580, %v548
        %vm597 = vcmp.gt.f32.partialorder %v581, %v549
        %vm598 = vcmp.gt.f32.partialorder %v582, %v550
        %vm599 = vcmp.gt.f32.partialorder %v583, %v551
        %vm600 = vcmp.gt.f32.partialorder %v584, %v552
        %vm601 = vcmp.gt.f32.partialorder %v585, %v553
        %vm602 = vcmp.gt.f32.partialorder %v586, %v554
        %vm603 = vcmp.gt.f32.partialorder %v587, %v555
        %v604 = vsel %vm588, %v572, %v540
        %v605 = vsel %vm589, %v573, %v541
        %v606 = vsel %vm590, %v574, %v542
        %v607 = vsel %vm591, %v575, %v543
        %v608 = vsel %vm592, %v576, %v544
        %v609 = vsel %vm593, %v577, %v545
        %v610 = vsel %vm594, %v578, %v546
        %v611 = vsel %vm595, %v579, %v547
        %v612 = vsel %vm596, %v580, %v548
        %v613 = vsel %vm597, %v581, %v549
        %v614 = vsel %vm598, %v582, %v550
        %v615 = vsel %vm599, %v583, %v551
        %v616 = vsel %vm600, %v584, %v552
        %v617 = vsel %vm601, %v585, %v553
        %v618 = vsel %vm602, %v586, %v554
        %v619 = vsel %vm603, %v587, %v555
        %v620 = vsel %vm588, 7, %v556
        %v621 = vsel %vm589, 7, %v557
        %v622 = vsel %vm590, 7, %v558
        %v623 = vsel %vm591, 7, %v559
        %v624 = vsel %vm592, 7, %v560
        %v625 = vsel %vm593, 7, %v561
        %v626 = vsel %vm594, 7, %v562
        %v627 = vsel %vm595, 7, %v563
        %v628 = vsel %vm596, 7, %v564
        %v629 = vsel %vm597, 7, %v565
        %v630 = vsel %vm598, 7, %v566
        %v631 = vsel %vm599, 7, %v567
        %v632 = vsel %vm600, 7, %v568
        %v633 = vsel %vm601, 7, %v569
        %v634 = vsel %vm602, 7, %v570
        %v635 = vsel %vm603, 7, %v571
        %vm636 = vcmp.ge.f32.partialorder %v604, 0.5
        %vm637 = vcmp.ge.f32.partialorder %v605, 0.5
        %vm638 = vcmp.ge.f32.partialorder %v606, 0.5
        %vm639 = vcmp.ge.f32.partialorder %v607, 0.5
        %vm640 = vcmp.ge.f32.partialorder %v608, 0.5
        %vm641 = vcmp.ge.f32.partialorder %v609, 0.5
        %vm642 = vcmp.ge.f32.partialorder %v610, 0.5
        %vm643 = vcmp.ge.f32.partialorder %v611, 0.5
        %vm644 = vcmp.ge.f32.partialorder %v612, 0.5
        %vm645 = vcmp.ge.f32.partialorder %v613, 0.5
        %vm646 = vcmp.ge.f32.partialorder %v614, 0.5
        %vm647 = vcmp.ge.f32.partialorder %v615, 0.5
        %vm648 = vcmp.ge.f32.partialorder %v616, 0.5
        %vm649 = vcmp.ge.f32.partialorder %v617, 0.5
        %vm650 = vcmp.ge.f32.partialorder %v618, 0.5
        %vm651 = vcmp.ge.f32.partialorder %v619, 0.5
        %v652 = vsel %vm636, 1, 0
        %v653 = vsel %vm637, 1, 0
        %v654 = vsel %vm638, 1, 0
        %v655 = vsel %vm639, 1, 0
        %v656 = vsel %vm640, 1, 0
        %v657 = vsel %vm641, 1, 0
        %v658 = vsel %vm642, 1, 0
        %v659 = vsel %vm643, 1, 0
        %v660 = vsel %vm644, 1, 0
        %v661 = vsel %vm645, 1, 0
        %v662 = vsel %vm646, 1, 0
        %v663 = vsel %vm647, 1, 0
        %v664 = vsel %vm648, 1, 0
        %v665 = vsel %vm649, 1, 0
        %v666 = vsel %vm650, 1, 0
        %v667 = vsel %vm651, 1, 0
        %vm668 = vcmask 1040384
        %v669 = vsel %vm668, %v652, 2147483648
        %v670 = vsel %vm668, %v653, 2147483648
        %v671 = vsel %vm668, %v654, 2147483648
        %v672 = vsel %vm668, %v655, 2147483648
        %v673 = vsel %vm668, %v656, 2147483648
        %vm674 = vcmp.gt.s32.totalorder %v669, %v673
        %v675 = vsel %vm674, %v669, %v673
        %v676 = vsel %vm668, %v657, 2147483648
        %vm677 = vcmp.gt.s32.totalorder %v670, %v676
        %v678 = vsel %vm677, %v670, %v676
        %v679 = vsel %vm668, %v658, 2147483648
        %vm680 = vcmp.gt.s32.totalorder %v671, %v679
        %v681 = vsel %vm680, %v671, %v679
        %v682 = vsel %vm668, %v659, 2147483648
        %vm683 = vcmp.gt.s32.totalorder %v672, %v682
        %v684 = vsel %vm683, %v672, %v682
        %v685 = vsel %vm668, %v660, 2147483648
        %vm686 = vcmp.gt.s32.totalorder %v675, %v685
        %v687 = vsel %vm686, %v675, %v685
        %v688 = vsel %vm668, %v661, 2147483648
        %vm689 = vcmp.gt.s32.totalorder %v678, %v688
        %v690 = vsel %vm689, %v678, %v688
        %v691 = vsel %vm668, %v662, 2147483648
        %vm692 = vcmp.gt.s32.totalorder %v681, %v691
        %v693 = vsel %vm692, %v681, %v691
        %v694 = vsel %vm668, %v663, 2147483648
        %vm695 = vcmp.gt.s32.totalorder %v684, %v694
        %v696 = vsel %vm695, %v684, %v694
        %v697 = vsel %vm668, %v664, 2147483648
        %vm698 = vcmp.gt.s32.totalorder %v687, %v697
        %v699 = vsel %vm698, %v687, %v697
        %v700 = vsel %vm668, %v665, 2147483648
        %vm701 = vcmp.gt.s32.totalorder %v690, %v700
        %v702 = vsel %vm701, %v690, %v700
        %v703 = vsel %vm668, %v666, 2147483648
        %vm704 = vcmp.gt.s32.totalorder %v693, %v703
        %v705 = vsel %vm704, %v693, %v703
        %v706 = vsel %vm668, %v667, 2147483648
        %vm707 = vcmp.gt.s32.totalorder %v696, %v706
        %v708 = vsel %vm707, %v696, %v706
        %vm709 = vcmp.gt.s32.totalorder %v699, %v702
        %v710 = vsel %vm709, %v699, %v702
        %vm711 = vcmp.gt.s32.totalorder %v705, %v708
        %v712 = vsel %vm711, %v705, %v708
        %vm713 = vcmp.gt.s32.totalorder %v710, %v712
        %v714 = vsel %vm713, %v710, %v712
        %v715 = vlaneseq
        %v716 = vshrl.u32 %v715, 7
        %v717 = vadd.s32 %v716, 8
        %v718 = vrot.slane %v716, 1
        %v719 = vrot.slane %v716, 2
        %v720 = vrot.slane %v716, 3
        %v721 = vrot.slane %v716, 4
        %v722 = vrot.slane %v716, 5
        %v723 = vrot.slane %v716, 6
        %v724 = vrot.slane %v716, 7
        %v725 = vrot.slane %v717, 1
        %v726 = vrot.slane %v717, 2
        %v727 = vrot.slane %v717, 3
        %v728 = vrot.slane %v717, 4
        %v729 = vrot.slane %v717, 5
        %v730 = vrot.slane %v717, 6
        %v731 = vrot.slane %v717, 7
        %v732 = vsel %vm636, %v716, 16
        %v733 = vsel %vm637, %v718, 16
        %v734 = vsel %vm638, %v719, 16
        %v735 = vsel %vm639, %v720, 16
        %v736 = vsel %vm640, %v721, 16
        %v737 = vsel %vm641, %v722, 16
        %v738 = vsel %vm642, %v723, 16
        %v739 = vsel %vm643, %v724, 16
        %v740 = vsel %vm644, %v717, 16
        %v741 = vsel %vm645, %v725, 16
        %v742 = vsel %vm646, %v726, 16
        %v743 = vsel %vm647, %v727, 16
        %v744 = vsel %vm648, %v728, 16
        %v745 = vsel %vm649, %v729, 16
        %v746 = vsel %vm650, %v730, 16
        %v747 = vsel %vm651, %v731, 16
        %v748 = vsel %vm668, %v732, 2147483647
        %v749 = vsel %vm668, %v733, 2147483647
        %v750 = vsel %vm668, %v734, 2147483647
        %v751 = vsel %vm668, %v735, 2147483647
        %v752 = vsel %vm668, %v736, 2147483647
        %vm753 = vcmp.lt.s32.totalorder %v748, %v752
        %v754 = vsel %vm753, %v748, %v752
        %v755 = vsel %vm668, %v737, 2147483647
        %vm756 = vcmp.lt.s32.totalorder %v749, %v755
        %v757 = vsel %vm756, %v749, %v755
        %v758 = vsel %vm668, %v738, 2147483647
        %vm759 = vcmp.lt.s32.totalorder %v750, %v758
        %v760 = vsel %vm759, %v750, %v758
        %v761 = vsel %vm668, %v739, 2147483647
        %vm762 = vcmp.lt.s32.totalorder %v751, %v761
        %v763 = vsel %vm762, %v751, %v761
        %v764 = vsel %vm668, %v740, 2147483647
        %vm765 = vcmp.lt.s32.totalorder %v754, %v764
        %v766 = vsel %vm765, %v754, %v764
        %v767 = vsel %vm668, %v741, 2147483647
        %vm768 = vcmp.lt.s32.totalorder %v757, %v767
        %v769 = vsel %vm768, %v757, %v767
        %v770 = vsel %vm668, %v742, 2147483647
        %vm771 = vcmp.lt.s32.totalorder %v760, %v770
        %v772 = vsel %vm771, %v760, %v770
        %v773 = vsel %vm668, %v743, 2147483647
        %vm774 = vcmp.lt.s32.totalorder %v763, %v773
        %v775 = vsel %vm774, %v763, %v773
        %v776 = vsel %vm668, %v744, 2147483647
        %vm777 = vcmp.lt.s32.totalorder %v766, %v776
        %v778 = vsel %vm777, %v766, %v776
        %v779 = vsel %vm668, %v745, 2147483647
        %vm780 = vcmp.lt.s32.totalorder %v769, %v779
        %v781 = vsel %vm780, %v769, %v779
        %v782 = vsel %vm668, %v746, 2147483647
        %vm783 = vcmp.lt.s32.totalorder %v772, %v782
        %v784 = vsel %vm783, %v772, %v782
        %v785 = vsel %vm668, %v747, 2147483647
        %vm786 = vcmp.lt.s32.totalorder %v775, %v785
        %v787 = vsel %vm786, %v775, %v785
        %vm788 = vcmp.lt.s32.totalorder %v778, %v781
        %v789 = vsel %vm788, %v778, %v781
        %vm790 = vcmp.lt.s32.totalorder %v784, %v787
        %v791 = vsel %vm790, %v784, %v787
        %vm792 = vcmp.lt.s32.totalorder %v789, %v791
        %v793 = vsel %vm792, %v789, %v791
        %vm794 = vcmp.gt.s32.totalorder %v714, 0
        %v795 = vsel %vm794, %v793, 0
        %v796 = vperm.slane %v795, 0
        %vm797 = vcmp.eq.s32.totalorder %v716, %v796
        %vm798 = vcmp.eq.s32.totalorder %v717, %v796
        %v799 = vrot.slane %v621, 7
        %vm800 = vcmask 1041409
        %v801 = vsel %vm800, %v799, %v620
        %v802 = vrot.slane %v622, 6
        %vm803 = vcmask 1042434
        %v804 = vsel %vm803, %v802, %v801
        %v805 = vrot.slane %v623, 5
        %vm806 = vcmask 1043459
        %v807 = vsel %vm806, %v805, %v804
        %v808 = vrot.slane %v624, 4
        %vm809 = vcmask 1044484
        %v810 = vsel %vm809, %v808, %v807
        %v811 = vrot.slane %v625, 3
        %vm812 = vcmask 1045509
        %v813 = vsel %vm812, %v811, %v810
        %v814 = vrot.slane %v626, 2
        %vm815 = vcmask 1046534
        %v816 = vsel %vm815, %v814, %v813
        %v817 = vrot.slane %v627, 1
        %vm818 = vcmask 1047559
        %v819 = vsel %vm818, %v817, %v816
        %v820 = vrot.slane %v629, 7
        %v821 = vsel %vm800, %v820, %v628
        %v822 = vrot.slane %v630, 6
        %v823 = vsel %vm803, %v822, %v821
        %v824 = vrot.slane %v631, 5
        %v825 = vsel %vm806, %v824, %v823
        %v826 = vrot.slane %v632, 4
        %v827 = vsel %vm809, %v826, %v825
        %v828 = vrot.slane %v633, 3
        %v829 = vsel %vm812, %v828, %v827
        %v830 = vrot.slane %v634, 2
        %v831 = vsel %vm815, %v830, %v829
        %v832 = vrot.slane %v635, 1
        %v833 = vsel %vm818, %v832, %v831
        %v834 = vsel %vm797, %v819, 4294967295
        %v835 = vsel %vm798, %v833, 4294967295
        %vm836 = vcmp.gt.s32.totalorder %v834, %v835
        %v837 = vsel %vm836, %v834, %v835
        %v838 = vrot.slane %v837, 4
        %vm839 = vcmp.gt.s32.totalorder %v837, %v838
        %v840 = vsel %vm839, %v837, %v838
        %v841 = vrot.slane %v840, 2
        %vm842 = vcmp.gt.s32.totalorder %v840, %v841
        %v843 = vsel %vm842, %v840, %v841
        %v844 = vrot.slane %v843, 1
        %vm845 = vcmp.gt.s32.totalorder %v843, %v844
        %v846 = vsel %vm845, %v843, %v844
        %847 = vst [vmem:[%s165] sm:$0x1] %v714
        %848 = vst [vmem:[%s171] sm:$0x1] %v846
        %s849 = sand.u32 %s57, 1
        %s850 = scalar_lea.sflag [#allocation4], %s849
        %s851 = sand.u32 %s57, 1
        %s852 = scalar_lea.vmem [#allocation5], %s851
        %s853 = sand.u32 %s83, 1
        %s854 = scalar_lea.sflag [#allocation7], %s853
        %s855 = sand.u32 %s83, 1
        %s856 = scalar_lea.vmem [#allocation6], %s855
        // Predicated region
        $region29: #{tpu_custom_call.1} parent=23 // pred_check
          %p857 = pneg %p67
        $region30: #{tpu_custom_call.1} parent=23 // pred_check_branch
          %859 = sbr.rel (%p857) target = $region32
        $region31: #{tpu_custom_call.1} parent=23 // pred_region
          %861 = vsyncadd %s850, 0
          %s862 = scalar_lea.hbm %s1, %s23
          %s864 = sshll.u32 %s852, 4
          %s865 = int_to_ptr.vmem [resolvable:$true] %s864
          %s866 = sshll.u32 %s862, 4
          %s867 = int_to_ptr.hbm [resolvable:$true] %s866
          %869 = dma.vmem_to_hbm [thread:$0]  %s865, 16, %s867, %s850
        $region32: #{tpu_custom_call.1} parent=23 // pred_fallthru
          _
        // Predicated region
        $region33: #{tpu_custom_call.1} parent=23 // pred_check
          %p870 = pneg %p93
        $region34: #{tpu_custom_call.1} parent=23 // pred_check_branch
          %872 = sbr.rel (%p870) target = $region36
        $region35: #{tpu_custom_call.1} parent=23 // pred_region
          %874 = vsyncadd %s854, 0
          %s875 = scalar_lea.hbm %s2, %s23
          %s877 = sshll.u32 %s856, 4
          %s878 = int_to_ptr.vmem [resolvable:$true] %s877
          %s879 = sshll.u32 %s875, 4
          %s880 = int_to_ptr.hbm [resolvable:$true] %s879
          %882 = dma.vmem_to_hbm [thread:$0]  %s878, 16, %s880, %s854
        $region36: #{tpu_custom_call.1} parent=23 // pred_fallthru
          _
      $region24: #{tpu_custom_call.1} parent=5 // pred_fallthru
        _
      %p883 = scmp.le.s32.totalorder 2, %s18
      // Predicated region
      $region37: #{tpu_custom_call.1} parent=5 // pred_check
        %p884 = pneg %p883
      $region38: #{tpu_custom_call.1} parent=5 // pred_check_branch
        %886 = sbr.rel (%p884) target = $region40
      $region39: #{tpu_custom_call.1} parent=5 // pred_region
        %s887 = ssub.s32 %s18, 2
        // Predicated region
        $region41: #{tpu_custom_call.1} parent=39 // pred_check
          %p888 = pneg %p73
        $region42: #{tpu_custom_call.1} parent=39 // pred_check_branch
          %890 = sbr.rel (%p888) target = $region44
        $region43: #{tpu_custom_call.1} parent=39 // pred_region
          %s891 = sand.u32 %s58, 1
          %s892 = scalar_lea.sflag [#allocation4], %s891
          %s893 = sand.u32 %s58, 1
          %s894 = scalar_lea.vmem [#allocation5], %s893
          %896 = dma.done %s892, 16
        $region44: #{tpu_custom_call.1} parent=39 // pred_fallthru
          _
        // Predicated region
        $region45: #{tpu_custom_call.1} parent=39 // pred_check
          %p897 = pneg %p99
        $region46: #{tpu_custom_call.1} parent=39 // pred_check_branch
          %899 = sbr.rel (%p897) target = $region48
        $region47: #{tpu_custom_call.1} parent=39 // pred_region
          %s900 = sand.u32 %s84, 1
          %s901 = scalar_lea.sflag [#allocation7], %s900
          %s902 = sand.u32 %s84, 1
          %s903 = scalar_lea.vmem [#allocation6], %s902
          %905 = dma.done %s901, 16
        $region48: #{tpu_custom_call.1} parent=39 // pred_fallthru
          _
      $region40: #{tpu_custom_call.1} parent=5 // pred_fallthru
        _
    $region6: #{tpu_custom_call.1} parent=1 // loop_footer
      %s22 = sadd.s32 1, %s18
    $region7: #{tpu_custom_call.1} parent=1 // loop_footer_branch
      %17 = sbr.rel target = $region3
    $region8: #{tpu_custom_call.1} parent=1 // loop_exit
      _
    %906 = vsyncpa [#allocation3], 1
    %s907 = scalar_lea.sflag [#allocation3], 1
    %908 = vsyncpa %s907, 1
    %909 = vsyncpa [#allocation4], 1
    %s910 = scalar_lea.sflag [#allocation4], 1
    %911 = vsyncpa %s910, 1
    %912 = vsyncpa [#allocation7], 1
    %s913 = scalar_lea.sflag [#allocation7], 1
    %914 = vsyncpa %s913, 1

</llo_original>
